<compile_context>
chip_gen: v7x
topology: tpu7x:2x2x1
jax: 0.10.0
libtpu: 0.0.40
codegen_flags: <defaults>
</compile_context>

<pallas_src>
import jax
import jax.numpy as jnp
import numpy as np
from jax.experimental import pallas as pl
from jax.experimental.pallas import tpu as pltpu


# ----------------------------------------------------------------------------
# Kernels
# ----------------------------------------------------------------------------
def _to_compute(x, w_ref):
    # Cast x to the MXU operand dtype if the wrapper passed it uncast
    # (aligned-shape fast path: avoids a wrapper-side HBM read+write pass).
    return x if x.dtype == w_ref.dtype else x.astype(w_ref.dtype)


def _mlp_bias_kernel(x_ref, w1_ref, b1_ref, w2_ref, b2_ref, o_ref):
    x = _to_compute(x_ref[...], w1_ref)
    h = jnp.dot(x, w1_ref[...], preferred_element_type=jnp.float32)
    h = jnp.maximum(h + b1_ref[...], 0.0)              # f32 VPU math (v5e-safe)
    o = jnp.dot(h.astype(w2_ref.dtype), w2_ref[...],
                preferred_element_type=jnp.float32)
    o_ref[...] = (o + b2_ref[...]).astype(o_ref.dtype)


def _mlp_nobias_kernel(x_ref, w1_ref, w2_ref, o_ref):
    x = _to_compute(x_ref[...], w1_ref)
    h = jnp.maximum(jnp.dot(x, w1_ref[...],
                            preferred_element_type=jnp.float32), 0.0)
    o_ref[...] = jnp.dot(h.astype(w2_ref.dtype), w2_ref[...],
                         preferred_element_type=jnp.float32).astype(o_ref.dtype)


def _mlp_bias_ksplit_kernel(x_ref, w1_ref, b1_ref, w2_ref, b2_ref,
                            o_ref, acc_ref):
    k = pl.program_id(1)

    @pl.when(k == 0)
    def _():
        acc_ref[...] = jnp.zeros_like(acc_ref)

    x = _to_compute(x_ref[...], w1_ref)
    h = jnp.dot(x, w1_ref[...], preferred_element_type=jnp.float32)
    h = jnp.maximum(h + b1_ref[...], 0.0)   # per-hidden-slice bias + relu is exact
    acc_ref[...] += jnp.dot(h.astype(w2_ref.dtype), w2_ref[...],
                            preferred_element_type=jnp.float32)

    @pl.when(k == pl.num_programs(1) - 1)
    def _():
        o_ref[...] = (acc_ref[...] + b2_ref[...]).astype(o_ref.dtype)


def _mlp_nobias_ksplit_kernel(x_ref, w1_ref, w2_ref, o_ref, acc_ref):
    k = pl.program_id(1)

    @pl.when(k == 0)
    def _():
        acc_ref[...] = jnp.zeros_like(acc_ref)

    x = _to_compute(x_ref[...], w1_ref)
    h = jnp.maximum(jnp.dot(x, w1_ref[...],
                            preferred_element_type=jnp.float32), 0.0)
    acc_ref[...] += jnp.dot(h.astype(w2_ref.dtype), w2_ref[...],
                            preferred_element_type=jnp.float32)

    @pl.when(k == pl.num_programs(1) - 1)
    def _():
        o_ref[...] = acc_ref[...].astype(o_ref.dtype)


# ----------------------------------------------------------------------------
# Planning helpers
# ----------------------------------------------------------------------------
def _round_up(x, m):
    return ((x + m - 1) // m) * m


def _cdiv(a, b):
    return (a + b - 1) // b


def _largest_tile_divisor(b8, cap_rows):
    """Largest multiple of 8 that divides b8 and is <= cap_rows (>= 8)."""
    units = b8 // 8
    cap = max(1, cap_rows // 8)
    best, d = 1, 1
    while d * d <= units:
        if units % d == 0:
            if d <= cap:
                best = max(best, d)
            q = units // d
            if q <= cap:
                best = max(best, q)
        d += 1
    return best * 8


def _tpu_generation():
    """Best-effort (physical VMEM bytes per TensorCore, TensorCores per chip)."""
    vmem = 128 * 1024 * 1024
    try:
        vmem = int(pltpu.get_tpu_info().vmem_capacity_bytes)
    except Exception:
        pass
    kind = ""
    try:
        kind = jax.devices()[0].device_kind.lower()
    except Exception:
        pass
    cores = 2 if ("v7" in kind or vmem <= 64 * 1024 * 1024) else 1
    return vmem, cores


def _vmem_budget_and_limit(vmem_bytes):
    if vmem_bytes <= 64 * 1024 * 1024:              # v7x-class: 64 MiB per TC
        return 24 * 1024 * 1024, 48 * 1024 * 1024
    return 80 * 1024 * 1024, 96 * 1024 * 1024       # v5e / v6e: 128 MiB physical


# ----------------------------------------------------------------------------
# Prepared (padded / cast once) parameters
# ----------------------------------------------------------------------------
class PreparedMLP:
    """Weights padded to lane-dense (128-multiple) shapes and cast to the MXU
    compute dtype ONCE at init, so forward never pays a per-call pad/cast pass."""

    def __init__(self, w1, w2, b1=None, b2=None, compute_dtype=jnp.bfloat16):
        in_dim, hidden = w1.shape
        assert w2.shape[0] == hidden
        out_dim = w2.shape[1]
        self.in_dim, self.hidden, self.out_dim = in_dim, hidden, out_dim
        self.compute_dtype = compute_dtype

        self.in_p = _round_up(in_dim, 128)
        self.out_p = _round_up(out_dim, 128)
        h_p = _round_up(hidden, 128)

        vmem_bytes, self.num_cores = _tpu_generation()
        self.budget, self.vmem_limit = _vmem_budget_and_limit(vmem_bytes)

        # Decide whether the hidden (contraction) dim needs its own grid axis
        # so the weight blocks fit VMEM (prevents OOM for large hidden dims).
        wb = np.dtype(compute_dtype).itemsize
        bias_bytes = (4 * (h_p + self.out_p)) if b1 is not None else 0
        full_w_bytes = wb * (self.in_p * h_p + h_p * self.out_p)  # single-buffered
        if full_w_bytes + bias_bytes <= self.budget // 2:
            tk = h_p
        else:
            per_col = 2 * wb * (self.in_p + self.out_p)           # double-buffered
            tk = ((self.budget // 2 - bias_bytes) // max(per_col, 1)) // 128 * 128
            tk = min(max(128, tk), h_p)
        self.tk = tk
        self.nk = _cdiv(h_p, tk)
        h_p = self.nk * tk                         # extra zero padding is exact
        self.h_p = h_p

        self.w1p = jnp.zeros((self.in_p, h_p), compute_dtype)
        self.w1p = self.w1p.at[:in_dim, :hidden].set(w1.astype(compute_dtype))
        self.w2p = jnp.zeros((h_p, self.out_p), compute_dtype)
        self.w2p = self.w2p.at[:hidden, :out_dim].set(w2.astype(compute_dtype))
        if b1 is not None:
            self.b1p = jnp.zeros((1, h_p), jnp.float32)
            self.b1p = self.b1p.at[0, :hidden].set(
                b1.reshape(-1).astype(jnp.float32))
            self.b2p = jnp.zeros((1, self.out_p), jnp.float32)
            self.b2p = self.b2p.at[0, :out_dim].set(
                b2.reshape(-1).astype(jnp.float32))
        else:
            self.b1p = None
            self.b2p = None


def _pick_batch_tile(b8, prep, x_bytes, out_bytes):
    wb = np.dtype(prep.compute_dtype).itemsize
    bias_bytes = (4 * (prep.h_p + prep.out_p)) if prep.b1p is not None else 0
    if prep.nk == 1:
        # Grid-invariant weights: single-buffered (pl.Buffered(1)).
        weight_vmem = wb * (prep.in_p * prep.h_p + prep.h_p * prep.out_p) + bias_bytes
        hidden_tmp, acc_tmp = 4 * prep.h_p, 0
    else:
        # Hidden-tiled weights: double-buffered across the K grid axis.
        weight_vmem = 2 * wb * (prep.in_p * prep.tk + prep.tk * prep.out_p) + bias_bytes
        hidden_tmp, acc_tmp = 4 * prep.tk, 4 * prep.out_p
    per_row = (2 * x_bytes * prep.in_p        # double-buffered x tile
               + 2 * out_bytes * prep.out_p   # double-buffered out tile
               + hidden_tmp                   # f32 hidden activation
               + acc_tmp                      # f32 accumulator scratch
               + 4 * prep.out_p)              # f32 second-matmul result
    rows = max(8, (prep.budget - weight_vmem) // per_row)
    tb = _largest_tile_divisor(b8, min(1024, rows))
    # Feed both TensorCores on multi-TC chips (v7x); pointless on v5e/v6e.
    if prep.num_cores >= 2 and b8 // tb < 2 and b8 >= 16:
        tb = _largest_tile_divisor(b8, b8 // 2)
    return tb


# ----------------------------------------------------------------------------
# Forward
# ----------------------------------------------------------------------------
def manifold_forward_prepared(x, prep, out_dtype=jnp.float32):
    """relu(x @ W1 [+ b1]) @ W2 [+ b2] using cached padded weights."""
    B, in_dim = x.shape
    assert in_dim == prep.in_dim
    b8 = _round_up(B, 8)

    if B != b8 or in_dim != prep.in_p:
        # Pad + cast in one pass (zero padding is exact for both matmuls).
        xk = jnp.zeros((b8, prep.in_p), prep.compute_dtype)
        xk = xk.at[:B, :in_dim].set(x.astype(prep.compute_dtype))
    else:
        xk = x  # aligned fast path: cast inside the kernel, single HBM pass

    tb = _pick_batch_tile(b8, prep,
                          np.dtype(xk.dtype).itemsize,
                          np.dtype(out_dtype).itemsize)
    grid_b = b8 // tb
    use_bias = prep.b1p is not None
    out_shape = jax.ShapeDtypeStruct((b8, prep.out_p), out_dtype)

    if prep.nk == 1:
        kernel = _mlp_bias_kernel if use_bias else _mlp_nobias_kernel
        args = ((xk, prep.w1p, prep.b1p, prep.w2p, prep.b2p) if use_bias
                else (xk, prep.w1p, prep.w2p))

        def build_specs(single_buffer):
            kw = {"pipeline_mode": pl.Buffered(1)} if single_buffer else {}
            specs = [pl.BlockSpec((tb, prep.in_p), lambda i: (i, 0)),
                     pl.BlockSpec((prep.in_p, prep.h_p), lambda i: (0, 0), **kw)]
            if use_bias:
                specs.append(pl.BlockSpec((1, prep.h_p), lambda i: (0, 0), **kw))
            specs.append(pl.BlockSpec((prep.h_p, prep.out_p), lambda i: (0, 0), **kw))
            if use_bias:
                specs.append(pl.BlockSpec((1, prep.out_p), lambda i: (0, 0), **kw))
            return specs

        out, last_err = None, None
        for single_buffer in (True, False):
            try:
                out = pl.pallas_call(
                    kernel,
                    out_shape=out_shape,
                    grid_spec=pltpu.PrefetchScalarGridSpec(
                        num_scalar_prefetch=0,
                        grid=(grid_b,),
                        in_specs=build_specs(single_buffer),
                        out_specs=pl.BlockSpec((tb, prep.out_p),
                                               lambda i: (i, 0))),
                    compiler_params=pltpu.CompilerParams(
                        dimension_semantics=("parallel",),
                        vmem_limit_bytes=prep.vmem_limit),
                )(*args)
                break
            except Exception as err:   # fall back to default double-buffering
                last_err = err
        if out is None:
            raise last_err
    else:
        kernel = _mlp_bias_ksplit_kernel if use_bias else _mlp_nobias_ksplit_kernel
        if use_bias:
            args = (xk, prep.w1p, prep.b1p, prep.w2p, prep.b2p)
            in_specs = [
                pl.BlockSpec((tb, prep.in_p), lambda i, k: (i, 0)),
                pl.BlockSpec((prep.in_p, prep.tk), lambda i, k: (0, k)),
                pl.BlockSpec((1, prep.tk), lambda i, k: (0, k)),
                pl.BlockSpec((prep.tk, prep.out_p), lambda i, k: (k, 0)),
                pl.BlockSpec((1, prep.out_p), lambda i, k: (0, 0)),
            ]
        else:
            args = (xk, prep.w1p, prep.w2p)
            in_specs = [
                pl.BlockSpec((tb, prep.in_p), lambda i, k: (i, 0)),
                pl.BlockSpec((prep.in_p, prep.tk), lambda i, k: (0, k)),
                pl.BlockSpec((prep.tk, prep.out_p), lambda i, k: (k, 0)),
            ]
        out = pl.pallas_call(
            kernel,
            out_shape=out_shape,
            grid_spec=pltpu.PrefetchScalarGridSpec(
                num_scalar_prefetch=0,
                grid=(grid_b, prep.nk),
                in_specs=in_specs,
                out_specs=pl.BlockSpec((tb, prep.out_p), lambda i, k: (i, 0)),
                scratch_shapes=[pltpu.VMEM((tb, prep.out_p), jnp.float32)]),
            compiler_params=pltpu.CompilerParams(
                dimension_semantics=("parallel", "arbitrary"),
                vmem_limit_bytes=prep.vmem_limit),
        )(*args)

    if B != b8 or prep.out_dim != prep.out_p:
        out = out[:B, :prep.out_dim]
    return out


def manifold_network_forward(x, w1, w2, b1=None, b2=None,
                             out_dtype=jnp.float32):
    """One-shot convenience wrapper (prepares weights on the fly)."""
    return manifold_forward_prepared(x, PreparedMLP(w1, w2, b1, b2), out_dtype)


# ----------------------------------------------------------------------------
# Module
# ----------------------------------------------------------------------------
class ManifoldNetworkJAX:
    """JAX/Pallas re-implementation of ManifoldNetwork's forward pass."""

    def __init__(self, input_dim, hidden_dim, output_dim, optimization_method, key):
        self.optimization_method = optimization_method
        k1, k2, k3, k4 = jax.random.split(key, 4)
        if optimization_method == "geodesic":
            # TODO(synk): geoopt EuclideanStiefelExact retraction only affects
            # training updates, not forward math; plain randn init stands in.
            self.layer1_weight = jax.random.normal(
                k1, (hidden_dim, input_dim), jnp.float32)
            self.layer2_weight = jax.random.normal(
                k2, (hidden_dim, output_dim), jnp.float32)
            self._prep = PreparedMLP(self.layer1_weight.T, self.layer2_weight)
        else:
            bound1 = 1.0 / (input_dim ** 0.5)
            bound2 = 1.0 / (hidden_dim ** 0.5)
            self.l1_w = jax.random.uniform(
                k1, (hidden_dim, input_dim), jnp.float32, -bound1, bound1)
            self.l1_b = jax.random.uniform(
                k2, (hidden_dim,), jnp.float32, -bound1, bound1)
            self.l2_w = jax.random.uniform(
                k3, (output_dim, hidden_dim), jnp.float32, -bound2, bound2)
            self.l2_b = jax.random.uniform(
                k4, (output_dim,), jnp.float32, -bound2, bound2)
            self._prep = PreparedMLP(self.l1_w.T, self.l2_w.T,
                                     self.l1_b, self.l2_b)

    def forward(self, x):
        return manifold_forward_prepared(x, self._prep)

    __call__ = forward

    def forward_ref(self, x):
        """Pure-JAX reference mirroring the kernel's bf16-operand / f32-accum math."""
        cd = jnp.bfloat16
        if self.optimization_method == "geodesic":
            h = jnp.maximum(jnp.dot(x.astype(cd), self.layer1_weight.T.astype(cd),
                                    preferred_element_type=jnp.float32), 0.0)
            return jnp.dot(h.astype(cd), self.layer2_weight.astype(cd),
                           preferred_element_type=jnp.float32)
        h = jnp.dot(x.astype(cd), self.l1_w.T.astype(cd),
                    preferred_element_type=jnp.float32) + self.l1_b
        h = jnp.maximum(h, 0.0)
        return jnp.dot(h.astype(cd), self.l2_w.T.astype(cd),
                       preferred_element_type=jnp.float32) + self.l2_b


if __name__ == "__main__":
    key = jax.random.PRNGKey(0)
    k_x, k_geo, k_std = jax.random.split(key, 3)

    batch, input_dim, hidden_dim, output_dim = 16, 16, 32, 8
    x = jax.random.normal(k_x, (batch, input_dim), jnp.float32)

    ok = True
    for method, k in (("geodesic", k_geo), ("standard", k_std)):
        net = ManifoldNetworkJAX(input_dim, hidden_dim, output_dim, method, k)
        out = jax.block_until_ready(net.forward(x))
        ref = net.forward_ref(x)
        if out.shape != (batch, output_dim):
            ok = False
        if not jnp.allclose(out, ref, atol=2e-2, rtol=2e-2):
            ok = False

    if ok:
        print("KERNEL_OK")
</pallas_src>

<mosaic_0001>
module attributes {stable_mosaic.version = 11 : i64} {
  func.func @_mlp_nobias_kernel(%arg0: i32, %arg1: memref<16x128xbf16, #tpu.memory_space<vmem>>, %arg2: memref<128x128xbf16, #tpu.memory_space<vmem>>, %arg3: memref<128x128xbf16, #tpu.memory_space<vmem>>, %arg4: memref<16x128xf32, #tpu.memory_space<vmem>>) attributes {dimension_semantics = [#tpu.dimension_semantics<parallel>], iteration_bounds = array<i64: 1>, scalar_prefetch = 0 : i64, scratch_operands = 0 : i64, tpu.core_type = #tpu.core_type<tc>, window_params = [{transform_indices = @transform_0, window_bounds = array<i64: 16, 128>}, {pipeline_mode = #tpu.pipeline_mode<synchronous>, transform_indices = @transform_1, window_bounds = array<i64: 128, 128>}, {pipeline_mode = #tpu.pipeline_mode<synchronous>, transform_indices = @transform_2, window_bounds = array<i64: 128, 128>}, {transform_indices = @transform_3, window_bounds = array<i64: 16, 128>}]} {
    %c0 = arith.constant 0 : index
    %c0_0 = arith.constant 0 : index
    %0 = vector.load %arg1[%c0, %c0_0] : memref<16x128xbf16, #tpu.memory_space<vmem>>, vector<16x128xbf16>
    %c0_1 = arith.constant 0 : index
    %c0_2 = arith.constant 0 : index
    %1 = vector.load %arg2[%c0_1, %c0_2] : memref<128x128xbf16, #tpu.memory_space<vmem>>, vector<128x128xbf16>
    %cst = arith.constant dense<0.000000e+00> : vector<16x128xf32>
    %2 = tpu.matmul %0, %1, %cst {dimension_numbers = #tpu.dot_dimension_numbers<[1], [0], [0], [1], [0, 0, 1, 1], [], []>} : vector<16x128xbf16>, vector<128x128xbf16>, vector<16x128xf32> -> vector<16x128xf32>
    %cst_3 = arith.constant 0.000000e+00 : f32
    %3 = vector.broadcast %cst_3 : f32 to vector<16x128xf32>
    %4 = arith.maximumf %2, %3 : vector<16x128xf32>
    %5 = arith.truncf %4 : vector<16x128xf32> to vector<16x128xbf16>
    %c0_4 = arith.constant 0 : index
    %c0_5 = arith.constant 0 : index
    %6 = vector.load %arg3[%c0_4, %c0_5] : memref<128x128xbf16, #tpu.memory_space<vmem>>, vector<128x128xbf16>
    %cst_6 = arith.constant dense<0.000000e+00> : vector<16x128xf32>
    %7 = tpu.matmul %5, %6, %cst_6 {dimension_numbers = #tpu.dot_dimension_numbers<[1], [0], [0], [1], [0, 0, 1, 1], [], []>} : vector<16x128xbf16>, vector<128x128xbf16>, vector<16x128xf32> -> vector<16x128xf32>
    %c0_7 = arith.constant 0 : index
    %c0_8 = arith.constant 0 : index
    %8 = vector.load %arg4[%c0_7, %c0_8] : memref<16x128xf32, #tpu.memory_space<vmem>>, vector<16x128xf32>
    tpu.vector_store %arg4[%c0_7, %c0_8], %7 {strides = array<i32>} : memref<16x128xf32, #tpu.memory_space<vmem>>, vector<16x128xf32>,
    return
  }
  func.func @transform_0(%arg0: i32) -> (i32, i32) {
    %c0_i32 = arith.constant 0 : i32
    %c0_i32_0 = arith.constant 0 : i32
    return %arg0, %c0_i32 : i32, i32
  }
  func.func @transform_1(%arg0: i32) -> (i32, i32) {
    %c0_i32 = arith.constant 0 : i32
    %c0_i32_0 = arith.constant 0 : i32
    %c0_i32_1 = arith.constant 0 : i32
    return %c0_i32, %c0_i32_0 : i32, i32
  }
  func.func @transform_2(%arg0: i32) -> (i32, i32) {
    %c0_i32 = arith.constant 0 : i32
    %c0_i32_0 = arith.constant 0 : i32
    %c0_i32_1 = arith.constant 0 : i32
    return %c0_i32, %c0_i32_0 : i32, i32
  }
  func.func @transform_3(%arg0: i32) -> (i32, i32) {
    %c0_i32 = arith.constant 0 : i32
    %c0_i32_0 = arith.constant 0 : i32
    return %arg0, %c0_i32 : i32, i32
  }
}

module attributes {stable_mosaic.version = 11 : i64} {
  func.func @_mlp_nobias_kernel(%arg0: i32, %arg1: memref<16x128xbf16, #tpu.memory_space<vmem>>, %arg2: memref<128x128xbf16, #tpu.memory_space<vmem>>, %arg3: memref<128x128xbf16, #tpu.memory_space<vmem>>, %arg4: memref<16x128xf32, #tpu.memory_space<vmem>>) attributes {dimension_semantics = [#tpu.dimension_semantics<parallel>], iteration_bounds = array<i64: 1>, scalar_prefetch = 0 : i64, scratch_operands = 0 : i64, tpu.core_type = #tpu.core_type<tc>, window_params = [{transform_indices = @transform_0, window_bounds = array<i64: 16, 128>}, {pipeline_mode = #tpu.pipeline_mode<synchronous>, transform_indices = @transform_1, window_bounds = array<i64: 128, 128>}, {pipeline_mode = #tpu.pipeline_mode<synchronous>, transform_indices = @transform_2, window_bounds = array<i64: 128, 128>}, {transform_indices = @transform_3, window_bounds = array<i64: 16, 128>}]} {
    %c0 = arith.constant 0 : index
    %c0_0 = arith.constant 0 : index
    %0 = vector.load %arg1[%c0, %c0_0] : memref<16x128xbf16, #tpu.memory_space<vmem>>, vector<16x128xbf16>
    %c0_1 = arith.constant 0 : index
    %c0_2 = arith.constant 0 : index
    %1 = vector.load %arg2[%c0_1, %c0_2] : memref<128x128xbf16, #tpu.memory_space<vmem>>, vector<128x128xbf16>
    %cst = arith.constant dense<0.000000e+00> : vector<16x128xf32>
    %2 = tpu.matmul %0, %1, %cst {dimension_numbers = #tpu.dot_dimension_numbers<[1], [0], [0], [1], [0, 0, 1, 1], [], []>} : vector<16x128xbf16>, vector<128x128xbf16>, vector<16x128xf32> -> vector<16x128xf32>
    %cst_3 = arith.constant 0.000000e+00 : f32
    %3 = vector.broadcast %cst_3 : f32 to vector<16x128xf32>
    %4 = arith.maximumf %2, %3 : vector<16x128xf32>
    %5 = arith.truncf %4 : vector<16x128xf32> to vector<16x128xbf16>
    %c0_4 = arith.constant 0 : index
    %c0_5 = arith.constant 0 : index
    %6 = vector.load %arg3[%c0_4, %c0_5] : memref<128x128xbf16, #tpu.memory_space<vmem>>, vector<128x128xbf16>
    %cst_6 = arith.constant dense<0.000000e+00> : vector<16x128xf32>
    %7 = tpu.matmul %5, %6, %cst_6 {dimension_numbers = #tpu.dot_dimension_numbers<[1], [0], [0], [1], [0, 0, 1, 1], [], []>} : vector<16x128xbf16>, vector<128x128xbf16>, vector<16x128xf32> -> vector<16x128xf32>
    %c0_7 = arith.constant 0 : index
    %c0_8 = arith.constant 0 : index
    %8 = vector.load %arg4[%c0_7, %c0_8] : memref<16x128xf32, #tpu.memory_space<vmem>>, vector<16x128xf32>
    tpu.vector_store %arg4[%c0_7, %c0_8], %7 {strides = array<i32>} : memref<16x128xf32, #tpu.memory_space<vmem>>, vector<16x128xf32>,
    return
  }
  func.func @transform_0(%arg0: i32) -> (i32, i32) {
    %c0_i32 = arith.constant 0 : i32
    %c0_i32_0 = arith.constant 0 : i32
    return %arg0, %c0_i32 : i32, i32
  }
  func.func @transform_1(%arg0: i32) -> (i32, i32) {
    %c0_i32 = arith.constant 0 : i32
    %c0_i32_0 = arith.constant 0 : i32
    %c0_i32_1 = arith.constant 0 : i32
    return %c0_i32, %c0_i32_0 : i32, i32
  }
  func.func @transform_2(%arg0: i32) -> (i32, i32) {
    %c0_i32 = arith.constant 0 : i32
    %c0_i32_0 = arith.constant 0 : i32
    %c0_i32_1 = arith.constant 0 : i32
    return %c0_i32, %c0_i32_0 : i32, i32
  }
  func.func @transform_3(%arg0: i32) -> (i32, i32) {
    %c0_i32 = arith.constant 0 : i32
    %c0_i32_0 = arith.constant 0 : i32
    return %arg0, %c0_i32 : i32, i32
  }
}

</mosaic_0001>

<llo_original>
// kernel: tpu_custom_call.1
$region0: #{tpu_custom_call.1}
  #allocation0 [shape = 'u32[]', space=smem, size = 0x4, offset = 0x4, fixed_abs, tag = 'smem constant byte address 0x4 - core index']
  #allocation1 [shape = 'u32[144,128]{1,0:T(1,128)}', space=vmem, size = 0x12000, scoped, tag = 'internal scratch']
  %s0 = inlined_call_operand.hbm [shape: bf16[16,128], index: 0, kind: input, shape index: {}]
  %s1 = inlined_call_operand.hbm [shape: bf16[128,128], index: 1, kind: input, shape index: {}]
  %s2 = inlined_call_operand.hbm [shape: bf16[128,128], index: 2, kind: input, shape index: {}]
  %s3 = inlined_call_operand.hbm [shape: f32[16,128], index: 3, kind: output, shape index: {}]
  %s4 = sld [smem:[#allocation0]]
  $region34: #{tpu_custom_call.1} parent=0
    _
  %s6 = ssub.s32 1, %s4
  %s7 = scalar_select 0, %s6, %s4
  $region1: #{tpu_custom_call.1} parent=0
    #allocation2 [shape = 'u8[4096]{0}', space=vmem, size = 0x1000, scoped, tag = 'input window, operand 0, single buffered']
    #allocation3 [shape = 's32[1]{0}', space=sflag, size = 0x4, scoped, tag = 'scoped memory for tpu_custom_call.1']
    #allocation4 [shape = 's32[1]{0}', space=sflag, size = 0x4, scoped, tag = 'scoped memory for tpu_custom_call.1']
    #allocation5 [shape = 'u8[32768]{0}', space=vmem, size = 0x8000, scoped, tag = 'input window, operand 1, single buffered']
    #allocation6 [shape = 's32[1]{0}', space=sflag, size = 0x4, scoped, tag = 'scoped memory for tpu_custom_call.1']
    #allocation7 [shape = 'u8[32768]{0}', space=vmem, size = 0x8000, scoped, tag = 'input window, operand 2, single buffered']
    #allocation8 [shape = 'u8[8192]{0}', space=vmem, size = 0x2000, scoped, tag = 'output window, operand 0, single buffered']
    %8 = vsyncpa [#allocation3], 0
    %9 = vsyncpa [#allocation6], 0
    %10 = vsyncpa [#allocation4], 0
    // Predicated region
    $region2: #{tpu_custom_call.1} parent=1 // pred_check
      _
    $region3: #{tpu_custom_call.1} parent=1 // pred_check_branch
      %12 = sbr.rel (0) target = $region5
    $region4: #{tpu_custom_call.1} parent=1 // pred_region
      %s14 = ssub.s32 128, 128
      %15 = vsyncadd [#allocation3], %s14
      %s16 = sshll.u32 [#allocation2], 4
      %s17 = int_to_ptr.vmem [resolvable:$true] %s16
      %22 = dma.hbm_to_vmem [thread:$0]  %s0, 128, %s17, [#allocation3], 64, 64, 4
    $region5: #{tpu_custom_call.1} parent=1 // pred_fallthru
      _
    // Predicated region
    $region6: #{tpu_custom_call.1} parent=1 // pred_check
      _
    $region7: #{tpu_custom_call.1} parent=1 // pred_check_branch
      %24 = sbr.rel (0) target = $region9
    $region8: #{tpu_custom_call.1} parent=1 // pred_region
      %s26 = ssub.s32 1024, 1024
      %27 = vsyncadd [#allocation6], %s26
      %s28 = sshll.u32 [#allocation5], 4
      %s29 = int_to_ptr.vmem [resolvable:$true] %s28
      %34 = dma.hbm_to_vmem [thread:$0]  %s1, 1024, %s29, [#allocation6], 64, 64, 4
    $region9: #{tpu_custom_call.1} parent=1 // pred_fallthru
      _
    // Predicated region
    $region10: #{tpu_custom_call.1} parent=1 // pred_check
      _
    $region11: #{tpu_custom_call.1} parent=1 // pred_check_branch
      %36 = sbr.rel (0) target = $region13
    $region12: #{tpu_custom_call.1} parent=1 // pred_region
      %s38 = ssub.s32 1024, 1024
      %39 = vsyncadd [#allocation6], %s38
      %s40 = sshll.u32 [#allocation7], 4
      %s41 = int_to_ptr.vmem [resolvable:$true] %s40
      %46 = dma.hbm_to_vmem [thread:$0]  %s2, 1024, %s41, [#allocation6], 64, 64, 4
    $region13: #{tpu_custom_call.1} parent=1 // pred_fallthru
      _
    // Predicated region
    $region14: #{tpu_custom_call.1} parent=1 // pred_check
      _
    $region15: #{tpu_custom_call.1} parent=1 // pred_check_branch
      %48 = sbr.rel (0) target = $region17
    $region16: #{tpu_custom_call.1} parent=1 // pred_region
      %49 = dma.done [#allocation3], 128
    $region17: #{tpu_custom_call.1} parent=1 // pred_fallthru
      _
    // Predicated region
    $region18: #{tpu_custom_call.1} parent=1 // pred_check
      _
    $region19: #{tpu_custom_call.1} parent=1 // pred_check_branch
      %51 = sbr.rel (0) target = $region21
    $region20: #{tpu_custom_call.1} parent=1 // pred_region
      %52 = dma.done [#allocation6], 1024
    $region21: #{tpu_custom_call.1} parent=1 // pred_fallthru
      _
    // Predicated region
    $region22: #{tpu_custom_call.1} parent=1 // pred_check
      _
    $region23: #{tpu_custom_call.1} parent=1 // pred_check_branch
      %54 = sbr.rel (0) target = $region25
    $region24: #{tpu_custom_call.1} parent=1 // pred_region
      %55 = dma.done [#allocation6], 1024
    $region25: #{tpu_custom_call.1} parent=1 // pred_fallthru
      _
    %v57 = vld [vmem:[#allocation2] sm:$0xf]
    %v58 = vld [vmem:[#allocation2 + $0x4] sm:$0xf]
    %v59 = vld [vmem:[#allocation5] sm:$0xf]
    %v60 = vld [vmem:[#allocation5 + $0x4] sm:$0xf]
    %v61 = vld [vmem:[#allocation5 + $0x8] sm:$0xf]
    %v62 = vld [vmem:[#allocation5 + $0xc] sm:$0xf]
    %v63 = vld [vmem:[#allocation5 + $0x10] sm:$0xf]
    %v64 = vld [vmem:[#allocation5 + $0x14] sm:$0xf]
    %v65 = vld [vmem:[#allocation5 + $0x18] sm:$0xf]
    %v66 = vld [vmem:[#allocation5 + $0x1c] sm:$0xf]
    %v67 = vld [vmem:[#allocation5 + $0x20] sm:$0xf]
    %v68 = vld [vmem:[#allocation5 + $0x24] sm:$0xf]
    %v69 = vld [vmem:[#allocation5 + $0x28] sm:$0xf]
    %v70 = vld [vmem:[#allocation5 + $0x2c] sm:$0xf]
    %v71 = vld [vmem:[#allocation5 + $0x30] sm:$0xf]
    %v72 = vld [vmem:[#allocation5 + $0x34] sm:$0xf]
    %v73 = vld [vmem:[#allocation5 + $0x38] sm:$0xf]
    %v74 = vld [vmem:[#allocation5 + $0x3c] sm:$0xf]
    %v77 = vunpack.c.l.b16 %v57
    %v78 = vunpack.c.l.b16 %v58
    %v79 = vpack.c.b16 %v78, %v77
    %v97 = vunpack.c.l.b16 %v59
    %v98 = vunpack.c.l.b16 %v60
    %v99 = vunpack.c.l.b16 %v61
    %v100 = vunpack.c.l.b16 %v62
    %v101 = vunpack.c.l.b16 %v63
    %v102 = vunpack.c.l.b16 %v64
    %v103 = vunpack.c.l.b16 %v65
    %v104 = vunpack.c.l.b16 %v66
    %v105 = vunpack.c.l.b16 %v67
    %v106 = vunpack.c.l.b16 %v68
    %v107 = vunpack.c.l.b16 %v69
    %v108 = vunpack.c.l.b16 %v70
    %v109 = vunpack.c.l.b16 %v71
    %v110 = vunpack.c.l.b16 %v72
    %v111 = vunpack.c.l.b16 %v73
    %v112 = vunpack.c.l.b16 %v74
    %v113 = vpack.c.b16 %v98, %v97
    %v114 = vpack.c.b16 %v100, %v99
    %v115 = vpack.c.b16 %v102, %v101
    %v116 = vpack.c.b16 %v104, %v103
    %v117 = vpack.c.b16 %v106, %v105
    %v118 = vpack.c.b16 %v108, %v107
    %v119 = vpack.c.b16 %v110, %v109
    %v120 = vpack.c.b16 %v112, %v111
    %129 = vmatprep.subr.bf16.mxu0 0
    %130 = vmatpush1.bf16.msra.mxu0 %v113
    %131 = vmatprep.subr.bf16.mxu0 0
    %132 = vmatpush1.bf16.msra.mxu0 %v114
    %133 = vmatprep.subr.bf16.mxu0 0
    %134 = vmatpush1.bf16.msra.mxu0 %v115
    %135 = vmatprep.subr.bf16.mxu0 0
    %136 = vmatpush1.bf16.msra.mxu0 %v116
    %137 = vmatprep.subr.bf16.mxu0 0
    %138 = vmatpush1.bf16.msra.mxu0 %v117
    %139 = vmatprep.subr.bf16.mxu0 0
    %140 = vmatpush1.bf16.msra.mxu0 %v118
    %141 = vmatprep.subr.bf16.mxu0 0
    %142 = vmatpush1.bf16.msra.mxu0 %v119
    %143 = vmatprep.subr.bf16.mxu0 0
    %144 = vmatpush1.bf16.msra.mxu0 %v120
    %145 = vmatprep.subr.bf16.mxu0 0
    %146 = vmatpush1.bf16.msra.mxu0 0
    %147 = vmatprep.subr.bf16.mxu0 0
    %148 = vmatpush1.bf16.msra.mxu0 0
    %149 = vmatprep.subr.bf16.mxu0 0
    %150 = vmatpush1.bf16.msra.mxu0 0
    %151 = vmatprep.subr.bf16.mxu0 0
    %152 = vmatpush1.bf16.msra.mxu0 0
    %153 = vmatprep.subr.bf16.mxu0 0
    %154 = vmatpush1.bf16.msra.mxu0 0
    %155 = vmatprep.subr.bf16.mxu0 0
    %156 = vmatpush1.bf16.msra.mxu0 0
    %157 = vmatprep.subr.bf16.mxu0 0
    %158 = vmatpush1.bf16.msra.mxu0 0
    %159 = vmatprep.subr.bf16.mxu0 0
    %160 = vmatpush1.bf16.msra.mxu0 0
    %161 = vmatprep.mubr.bf16.mxu0 0
    %162 = vmatmul.mubr.bf16.gmra.mrb[0].mxu0 %v79
    %v163 = vpop.f32.mrb[0].mxu0
    %v164 = vadd.f32 0.0, %v163
    %v165 = vpop.f32.mrb[0].mxu0
    %v166 = vpop.f32.mrb[0].mxu0
    %v167 = vadd.f32 0.0, %v166
    %v168 = vpop.f32.mrb[0].mxu0
    %169 = vdwg.mxu0
    %v170 = vmax.f32 %v164, 0.0
    %v171 = vmax.f32 %v167, 0.0
    %v172 = vpack.c.bf16 %v171, %v170
    %v173 = vld [vmem:[#allocation7] sm:$0xf]
    %v174 = vld [vmem:[#allocation7 + $0x4] sm:$0xf]
    %v175 = vld [vmem:[#allocation7 + $0x8] sm:$0xf]
    %v176 = vld [vmem:[#allocation7 + $0xc] sm:$0xf]
    %v177 = vld [vmem:[#allocation7 + $0x10] sm:$0xf]
    %v178 = vld [vmem:[#allocation7 + $0x14] sm:$0xf]
    %v179 = vld [vmem:[#allocation7 + $0x18] sm:$0xf]
    %v180 = vld [vmem:[#allocation7 + $0x1c] sm:$0xf]
    %v181 = vld [vmem:[#allocation7 + $0x20] sm:$0xf]
    %v182 = vld [vmem:[#allocation7 + $0x24] sm:$0xf]
    %v183 = vld [vmem:[#allocation7 + $0x28] sm:$0xf]
    %v184 = vld [vmem:[#allocation7 + $0x2c] sm:$0xf]
    %v185 = vld [vmem:[#allocation7 + $0x30] sm:$0xf]
    %v186 = vld [vmem:[#allocation7 + $0x34] sm:$0xf]
    %v187 = vld [vmem:[#allocation7 + $0x38] sm:$0xf]
    %v188 = vld [vmem:[#allocation7 + $0x3c] sm:$0xf]
    %v205 = vunpack.c.l.b16 %v173
    %v206 = vunpack.c.l.b16 %v174
    %v207 = vunpack.c.l.b16 %v175
    %v208 = vunpack.c.l.b16 %v176
    %v209 = vunpack.c.l.b16 %v177
    %v210 = vunpack.c.l.b16 %v178
    %v211 = vunpack.c.l.b16 %v179
    %v212 = vunpack.c.l.b16 %v180
    %v213 = vunpack.c.l.b16 %v181
    %v214 = vunpack.c.l.b16 %v182
    %v215 = vunpack.c.l.b16 %v183
    %v216 = vunpack.c.l.b16 %v184
    %v217 = vunpack.c.l.b16 %v185
    %v218 = vunpack.c.l.b16 %v186
    %v219 = vunpack.c.l.b16 %v187
    %v220 = vunpack.c.l.b16 %v188
    %v221 = vpack.c.b16 %v206, %v205
    %v222 = vpack.c.b16 %v208, %v207
    %v223 = vpack.c.b16 %v210, %v209
    %v224 = vpack.c.b16 %v212, %v211
    %v225 = vpack.c.b16 %v214, %v213
    %v226 = vpack.c.b16 %v216, %v215
    %v227 = vpack.c.b16 %v218, %v217
    %v228 = vpack.c.b16 %v220, %v219
    %237 = vmatprep.subr.bf16.mxu0 0
    %238 = vmatpush1.bf16.msra.mxu0 %v221
    %239 = vmatprep.subr.bf16.mxu0 0
    %240 = vmatpush1.bf16.msra.mxu0 %v222
    %241 = vmatprep.subr.bf16.mxu0 0
    %242 = vmatpush1.bf16.msra.mxu0 %v223
    %243 = vmatprep.subr.bf16.mxu0 0
    %244 = vmatpush1.bf16.msra.mxu0 %v224
    %245 = vmatprep.subr.bf16.mxu0 0
    %246 = vmatpush1.bf16.msra.mxu0 %v225
    %247 = vmatprep.subr.bf16.mxu0 0
    %248 = vmatpush1.bf16.msra.mxu0 %v226
    %249 = vmatprep.subr.bf16.mxu0 0
    %250 = vmatpush1.bf16.msra.mxu0 %v227
    %251 = vmatprep.subr.bf16.mxu0 0
    %252 = vmatpush1.bf16.msra.mxu0 %v228
    %253 = vmatprep.subr.bf16.mxu0 0
    %254 = vmatpush1.bf16.msra.mxu0 0
    %255 = vmatprep.subr.bf16.mxu0 0
    %256 = vmatpush1.bf16.msra.mxu0 0
    %257 = vmatprep.subr.bf16.mxu0 0
    %258 = vmatpush1.bf16.msra.mxu0 0
    %259 = vmatprep.subr.bf16.mxu0 0
    %260 = vmatpush1.bf16.msra.mxu0 0
    %261 = vmatprep.subr.bf16.mxu0 0
    %262 = vmatpush1.bf16.msra.mxu0 0
    %263 = vmatprep.subr.bf16.mxu0 0
    %264 = vmatpush1.bf16.msra.mxu0 0
    %265 = vmatprep.subr.bf16.mxu0 0
    %266 = vmatpush1.bf16.msra.mxu0 0
    %267 = vmatprep.subr.bf16.mxu0 0
    %268 = vmatpush1.bf16.msra.mxu0 0
    %269 = vmatprep.mubr.bf16.mxu0 0
    %270 = vmatmul.mubr.bf16.gmra.mrb[0].mxu0 %v172
    %v271 = vpop.f32.mrb[0].mxu0
    %v272 = vadd.f32 0.0, %v271
    %v273 = vpop.f32.mrb[0].mxu0
    %v274 = vpop.f32.mrb[0].mxu0
    %v275 = vadd.f32 0.0, %v274
    %v276 = vpop.f32.mrb[0].mxu0
    %277 = vdwg.mxu0
    %278 = vst [vmem:[#allocation8] sm:$0xff] %v272
    %279 = vst [vmem:[#allocation8 + $0x8] sm:$0xff] %v275
    // Predicated region
    $region26: #{tpu_custom_call.1} parent=1 // pred_check
      _
    $region27: #{tpu_custom_call.1} parent=1 // pred_check_branch
      %281 = sbr.rel (0) target = $region29
    $region28: #{tpu_custom_call.1} parent=1 // pred_region
      %s283 = ssub.s32 256, 256
      %284 = vsyncadd [#allocation4], %s283
      %s285 = sshll.u32 [#allocation8], 4
      %s286 = int_to_ptr.vmem [resolvable:$true] %s285
      %291 = dma.vmem_to_hbm [thread:$0]  %s286, 256, %s3, [#allocation4], 128, 128, 8
    $region29: #{tpu_custom_call.1} parent=1 // pred_fallthru
      _
    // Predicated region
    $region30: #{tpu_custom_call.1} parent=1 // pred_check
      _
    $region31: #{tpu_custom_call.1} parent=1 // pred_check_branch
      %293 = sbr.rel (0) target = $region33
    $region32: #{tpu_custom_call.1} parent=1 // pred_region
      %294 = dma.done [#allocation4], 256
    $region33: #{tpu_custom_call.1} parent=1 // pred_fallthru
      _
    %295 = vsyncpa [#allocation3], 1
    %296 = vsyncpa [#allocation6], 1
    %297 = vsyncpa [#allocation4], 1

// kernel: tpu_custom_call.1
$region0: #{tpu_custom_call.1}
  #allocation0 [shape = 'u32[]', space=smem, size = 0x4, offset = 0x4, fixed_abs, tag = 'smem constant byte address 0x4 - core index']
  #allocation1 [shape = 'u32[144,128]{1,0:T(1,128)}', space=vmem, size = 0x12000, scoped, tag = 'internal scratch']
  %s0 = inlined_call_operand.hbm [shape: bf16[16,128], index: 0, kind: input, shape index: {}]
  %s1 = inlined_call_operand.hbm [shape: bf16[128,128], index: 1, kind: input, shape index: {}]
  %s2 = inlined_call_operand.hbm [shape: bf16[128,128], index: 2, kind: input, shape index: {}]
  %s3 = inlined_call_operand.hbm [shape: f32[16,128], index: 3, kind: output, shape index: {}]
  %s4 = sld [smem:[#allocation0]]
  $region34: #{tpu_custom_call.1} parent=0
    _
  %s6 = ssub.s32 1, %s4
  %s7 = scalar_select 0, %s6, %s4
  $region1: #{tpu_custom_call.1} parent=0
    #allocation2 [shape = 'u8[4096]{0}', space=vmem, size = 0x1000, scoped, tag = 'input window, operand 0, single buffered']
    #allocation3 [shape = 's32[1]{0}', space=sflag, size = 0x4, scoped, tag = 'scoped memory for tpu_custom_call.1']
    #allocation4 [shape = 's32[1]{0}', space=sflag, size = 0x4, scoped, tag = 'scoped memory for tpu_custom_call.1']
    #allocation5 [shape = 'u8[32768]{0}', space=vmem, size = 0x8000, scoped, tag = 'input window, operand 1, single buffered']
    #allocation6 [shape = 's32[1]{0}', space=sflag, size = 0x4, scoped, tag = 'scoped memory for tpu_custom_call.1']
    #allocation7 [shape = 'u8[32768]{0}', space=vmem, size = 0x8000, scoped, tag = 'input window, operand 2, single buffered']
    #allocation8 [shape = 'u8[8192]{0}', space=vmem, size = 0x2000, scoped, tag = 'output window, operand 0, single buffered']
    %8 = vsyncpa [#allocation3], 0
    %9 = vsyncpa [#allocation6], 0
    %10 = vsyncpa [#allocation4], 0
    // Predicated region
    $region2: #{tpu_custom_call.1} parent=1 // pred_check
      _
    $region3: #{tpu_custom_call.1} parent=1 // pred_check_branch
      %12 = sbr.rel (0) target = $region5
    $region4: #{tpu_custom_call.1} parent=1 // pred_region
      %s14 = ssub.s32 128, 128
      %15 = vsyncadd [#allocation3], %s14
      %s16 = sshll.u32 [#allocation2], 4
      %s17 = int_to_ptr.vmem [resolvable:$true] %s16
      %22 = dma.hbm_to_vmem [thread:$0]  %s0, 128, %s17, [#allocation3], 64, 64, 4
    $region5: #{tpu_custom_call.1} parent=1 // pred_fallthru
      _
    // Predicated region
    $region6: #{tpu_custom_call.1} parent=1 // pred_check
      _
    $region7: #{tpu_custom_call.1} parent=1 // pred_check_branch
      %24 = sbr.rel (0) target = $region9
    $region8: #{tpu_custom_call.1} parent=1 // pred_region
      %s26 = ssub.s32 1024, 1024
      %27 = vsyncadd [#allocation6], %s26
      %s28 = sshll.u32 [#allocation5], 4
      %s29 = int_to_ptr.vmem [resolvable:$true] %s28
      %34 = dma.hbm_to_vmem [thread:$0]  %s1, 1024, %s29, [#allocation6], 64, 64, 4
    $region9: #{tpu_custom_call.1} parent=1 // pred_fallthru
      _
    // Predicated region
    $region10: #{tpu_custom_call.1} parent=1 // pred_check
      _
    $region11: #{tpu_custom_call.1} parent=1 // pred_check_branch
      %36 = sbr.rel (0) target = $region13
    $region12: #{tpu_custom_call.1} parent=1 // pred_region
      %s38 = ssub.s32 1024, 1024
      %39 = vsyncadd [#allocation6], %s38
      %s40 = sshll.u32 [#allocation7], 4
      %s41 = int_to_ptr.vmem [resolvable:$true] %s40
      %46 = dma.hbm_to_vmem [thread:$0]  %s2, 1024, %s41, [#allocation6], 64, 64, 4
    $region13: #{tpu_custom_call.1} parent=1 // pred_fallthru
      _
    // Predicated region
    $region14: #{tpu_custom_call.1} parent=1 // pred_check
      _
    $region15: #{tpu_custom_call.1} parent=1 // pred_check_branch
      %48 = sbr.rel (0) target = $region17
    $region16: #{tpu_custom_call.1} parent=1 // pred_region
      %49 = dma.done [#allocation3], 128
    $region17: #{tpu_custom_call.1} parent=1 // pred_fallthru
      _
    // Predicated region
    $region18: #{tpu_custom_call.1} parent=1 // pred_check
      _
    $region19: #{tpu_custom_call.1} parent=1 // pred_check_branch
      %51 = sbr.rel (0) target = $region21
    $region20: #{tpu_custom_call.1} parent=1 // pred_region
      %52 = dma.done [#allocation6], 1024
    $region21: #{tpu_custom_call.1} parent=1 // pred_fallthru
      _
    // Predicated region
    $region22: #{tpu_custom_call.1} parent=1 // pred_check
      _
    $region23: #{tpu_custom_call.1} parent=1 // pred_check_branch
      %54 = sbr.rel (0) target = $region25
    $region24: #{tpu_custom_call.1} parent=1 // pred_region
      %55 = dma.done [#allocation6], 1024
    $region25: #{tpu_custom_call.1} parent=1 // pred_fallthru
      _
    %v57 = vld [vmem:[#allocation2] sm:$0xf]
    %v58 = vld [vmem:[#allocation2 + $0x4] sm:$0xf]
    %v59 = vld [vmem:[#allocation5] sm:$0xf]
    %v60 = vld [vmem:[#allocation5 + $0x4] sm:$0xf]
    %v61 = vld [vmem:[#allocation5 + $0x8] sm:$0xf]
    %v62 = vld [vmem:[#allocation5 + $0xc] sm:$0xf]
    %v63 = vld [vmem:[#allocation5 + $0x10] sm:$0xf]
    %v64 = vld [vmem:[#allocation5 + $0x14] sm:$0xf]
    %v65 = vld [vmem:[#allocation5 + $0x18] sm:$0xf]
    %v66 = vld [vmem:[#allocation5 + $0x1c] sm:$0xf]
    %v67 = vld [vmem:[#allocation5 + $0x20] sm:$0xf]
    %v68 = vld [vmem:[#allocation5 + $0x24] sm:$0xf]
    %v69 = vld [vmem:[#allocation5 + $0x28] sm:$0xf]
    %v70 = vld [vmem:[#allocation5 + $0x2c] sm:$0xf]
    %v71 = vld [vmem:[#allocation5 + $0x30] sm:$0xf]
    %v72 = vld [vmem:[#allocation5 + $0x34] sm:$0xf]
    %v73 = vld [vmem:[#allocation5 + $0x38] sm:$0xf]
    %v74 = vld [vmem:[#allocation5 + $0x3c] sm:$0xf]
    %v77 = vunpack.c.l.b16 %v57
    %v78 = vunpack.c.l.b16 %v58
    %v79 = vpack.c.b16 %v78, %v77
    %v97 = vunpack.c.l.b16 %v59
    %v98 = vunpack.c.l.b16 %v60
    %v99 = vunpack.c.l.b16 %v61
    %v100 = vunpack.c.l.b16 %v62
    %v101 = vunpack.c.l.b16 %v63
    %v102 = vunpack.c.l.b16 %v64
    %v103 = vunpack.c.l.b16 %v65
    %v104 = vunpack.c.l.b16 %v66
    %v105 = vunpack.c.l.b16 %v67
    %v106 = vunpack.c.l.b16 %v68
    %v107 = vunpack.c.l.b16 %v69
    %v108 = vunpack.c.l.b16 %v70
    %v109 = vunpack.c.l.b16 %v71
    %v110 = vunpack.c.l.b16 %v72
    %v111 = vunpack.c.l.b16 %v73
    %v112 = vunpack.c.l.b16 %v74
    %v113 = vpack.c.b16 %v98, %v97
    %v114 = vpack.c.b16 %v100, %v99
    %v115 = vpack.c.b16 %v102, %v101
    %v116 = vpack.c.b16 %v104, %v103
    %v117 = vpack.c.b16 %v106, %v105
    %v118 = vpack.c.b16 %v108, %v107
    %v119 = vpack.c.b16 %v110, %v109
    %v120 = vpack.c.b16 %v112, %v111
    %129 = vmatprep.subr.bf16.mxu0 0
    %130 = vmatpush1.bf16.msra.mxu0 %v113
    %131 = vmatprep.subr.bf16.mxu0 0
    %132 = vmatpush1.bf16.msra.mxu0 %v114
    %133 = vmatprep.subr.bf16.mxu0 0
    %134 = vmatpush1.bf16.msra.mxu0 %v115
    %135 = vmatprep.subr.bf16.mxu0 0
    %136 = vmatpush1.bf16.msra.mxu0 %v116
    %137 = vmatprep.subr.bf16.mxu0 0
    %138 = vmatpush1.bf16.msra.mxu0 %v117
    %139 = vmatprep.subr.bf16.mxu0 0
    %140 = vmatpush1.bf16.msra.mxu0 %v118
    %141 = vmatprep.subr.bf16.mxu0 0
    %142 = vmatpush1.bf16.msra.mxu0 %v119
    %143 = vmatprep.subr.bf16.mxu0 0
    %144 = vmatpush1.bf16.msra.mxu0 %v120
    %145 = vmatprep.subr.bf16.mxu0 0
    %146 = vmatpush1.bf16.msra.mxu0 0
    %147 = vmatprep.subr.bf16.mxu0 0
    %148 = vmatpush1.bf16.msra.mxu0 0
    %149 = vmatprep.subr.bf16.mxu0 0
    %150 = vmatpush1.bf16.msra.mxu0 0
    %151 = vmatprep.subr.bf16.mxu0 0
    %152 = vmatpush1.bf16.msra.mxu0 0
    %153 = vmatprep.subr.bf16.mxu0 0
    %154 = vmatpush1.bf16.msra.mxu0 0
    %155 = vmatprep.subr.bf16.mxu0 0
    %156 = vmatpush1.bf16.msra.mxu0 0
    %157 = vmatprep.subr.bf16.mxu0 0
    %158 = vmatpush1.bf16.msra.mxu0 0
    %159 = vmatprep.subr.bf16.mxu0 0
    %160 = vmatpush1.bf16.msra.mxu0 0
    %161 = vmatprep.mubr.bf16.mxu0 0
    %162 = vmatmul.mubr.bf16.gmra.mrb[0].mxu0 %v79
    %v163 = vpop.f32.mrb[0].mxu0
    %v164 = vadd.f32 0.0, %v163
    %v165 = vpop.f32.mrb[0].mxu0
    %v166 = vpop.f32.mrb[0].mxu0
    %v167 = vadd.f32 0.0, %v166
    %v168 = vpop.f32.mrb[0].mxu0
    %169 = vdwg.mxu0
    %v170 = vmax.f32 %v164, 0.0
    %v171 = vmax.f32 %v167, 0.0
    %v172 = vpack.c.bf16 %v171, %v170
    %v173 = vld [vmem:[#allocation7] sm:$0xf]
    %v174 = vld [vmem:[#allocation7 + $0x4] sm:$0xf]
    %v175 = vld [vmem:[#allocation7 + $0x8] sm:$0xf]
    %v176 = vld [vmem:[#allocation7 + $0xc] sm:$0xf]
    %v177 = vld [vmem:[#allocation7 + $0x10] sm:$0xf]
    %v178 = vld [vmem:[#allocation7 + $0x14] sm:$0xf]
    %v179 = vld [vmem:[#allocation7 + $0x18] sm:$0xf]
    %v180 = vld [vmem:[#allocation7 + $0x1c] sm:$0xf]
    %v181 = vld [vmem:[#allocation7 + $0x20] sm:$0xf]
    %v182 = vld [vmem:[#allocation7 + $0x24] sm:$0xf]
    %v183 = vld [vmem:[#allocation7 + $0x28] sm:$0xf]
    %v184 = vld [vmem:[#allocation7 + $0x2c] sm:$0xf]
    %v185 = vld [vmem:[#allocation7 + $0x30] sm:$0xf]
    %v186 = vld [vmem:[#allocation7 + $0x34] sm:$0xf]
    %v187 = vld [vmem:[#allocation7 + $0x38] sm:$0xf]
    %v188 = vld [vmem:[#allocation7 + $0x3c] sm:$0xf]
    %v205 = vunpack.c.l.b16 %v173
    %v206 = vunpack.c.l.b16 %v174
    %v207 = vunpack.c.l.b16 %v175
    %v208 = vunpack.c.l.b16 %v176
    %v209 = vunpack.c.l.b16 %v177
    %v210 = vunpack.c.l.b16 %v178
    %v211 = vunpack.c.l.b16 %v179
    %v212 = vunpack.c.l.b16 %v180
    %v213 = vunpack.c.l.b16 %v181
    %v214 = vunpack.c.l.b16 %v182
    %v215 = vunpack.c.l.b16 %v183
    %v216 = vunpack.c.l.b16 %v184
    %v217 = vunpack.c.l.b16 %v185
    %v218 = vunpack.c.l.b16 %v186
    %v219 = vunpack.c.l.b16 %v187
    %v220 = vunpack.c.l.b16 %v188
    %v221 = vpack.c.b16 %v206, %v205
    %v222 = vpack.c.b16 %v208, %v207
    %v223 = vpack.c.b16 %v210, %v209
    %v224 = vpack.c.b16 %v212, %v211
    %v225 = vpack.c.b16 %v214, %v213
    %v226 = vpack.c.b16 %v216, %v215
    %v227 = vpack.c.b16 %v218, %v217
    %v228 = vpack.c.b16 %v220, %v219
    %237 = vmatprep.subr.bf16.mxu0 0
    %238 = vmatpush1.bf16.msra.mxu0 %v221
    %239 = vmatprep.subr.bf16.mxu0 0
    %240 = vmatpush1.bf16.msra.mxu0 %v222
    %241 = vmatprep.subr.bf16.mxu0 0
    %242 = vmatpush1.bf16.msra.mxu0 %v223
    %243 = vmatprep.subr.bf16.mxu0 0
    %244 = vmatpush1.bf16.msra.mxu0 %v224
    %245 = vmatprep.subr.bf16.mxu0 0
    %246 = vmatpush1.bf16.msra.mxu0 %v225
    %247 = vmatprep.subr.bf16.mxu0 0
    %248 = vmatpush1.bf16.msra.mxu0 %v226
    %249 = vmatprep.subr.bf16.mxu0 0
    %250 = vmatpush1.bf16.msra.mxu0 %v227
    %251 = vmatprep.subr.bf16.mxu0 0
    %252 = vmatpush1.bf16.msra.mxu0 %v228
    %253 = vmatprep.subr.bf16.mxu0 0
    %254 = vmatpush1.bf16.msra.mxu0 0
    %255 = vmatprep.subr.bf16.mxu0 0
    %256 = vmatpush1.bf16.msra.mxu0 0
    %257 = vmatprep.subr.bf16.mxu0 0
    %258 = vmatpush1.bf16.msra.mxu0 0
    %259 = vmatprep.subr.bf16.mxu0 0
    %260 = vmatpush1.bf16.msra.mxu0 0
    %261 = vmatprep.subr.bf16.mxu0 0
    %262 = vmatpush1.bf16.msra.mxu0 0
    %263 = vmatprep.subr.bf16.mxu0 0
    %264 = vmatpush1.bf16.msra.mxu0 0
    %265 = vmatprep.subr.bf16.mxu0 0
    %266 = vmatpush1.bf16.msra.mxu0 0
    %267 = vmatprep.subr.bf16.mxu0 0
    %268 = vmatpush1.bf16.msra.mxu0 0
    %269 = vmatprep.mubr.bf16.mxu0 0
    %270 = vmatmul.mubr.bf16.gmra.mrb[0].mxu0 %v172
    %v271 = vpop.f32.mrb[0].mxu0
    %v272 = vadd.f32 0.0, %v271
    %v273 = vpop.f32.mrb[0].mxu0
    %v274 = vpop.f32.mrb[0].mxu0
    %v275 = vadd.f32 0.0, %v274
    %v276 = vpop.f32.mrb[0].mxu0
    %277 = vdwg.mxu0
    %278 = vst [vmem:[#allocation8] sm:$0xff] %v272
    %279 = vst [vmem:[#allocation8 + $0x8] sm:$0xff] %v275
    // Predicated region
    $region26: #{tpu_custom_call.1} parent=1 // pred_check
      _
    $region27: #{tpu_custom_call.1} parent=1 // pred_check_branch
      %281 = sbr.rel (0) target = $region29
    $region28: #{tpu_custom_call.1} parent=1 // pred_region
      %s283 = ssub.s32 256, 256
      %284 = vsyncadd [#allocation4], %s283
      %s285 = sshll.u32 [#allocation8], 4
      %s286 = int_to_ptr.vmem [resolvable:$true] %s285
      %291 = dma.vmem_to_hbm [thread:$0]  %s286, 256, %s3, [#allocation4], 128, 128, 8
    $region29: #{tpu_custom_call.1} parent=1 // pred_fallthru
      _
    // Predicated region
    $region30: #{tpu_custom_call.1} parent=1 // pred_check
      _
    $region31: #{tpu_custom_call.1} parent=1 // pred_check_branch
      %293 = sbr.rel (0) target = $region33
    $region32: #{tpu_custom_call.1} parent=1 // pred_region
      %294 = dma.done [#allocation4], 256
    $region33: #{tpu_custom_call.1} parent=1 // pred_fallthru
      _
    %295 = vsyncpa [#allocation3], 1
    %296 = vsyncpa [#allocation6], 1
    %297 = vsyncpa [#allocation4], 1

</llo_original>
